<compile_context>
chip_gen: v7x
topology: tpu7x:2x2x1
jax: 0.10.0
libtpu: 0.0.40
codegen_flags: <defaults>
</compile_context>

<pallas_src>
import jax
import jax.numpy as jnp
from jax.experimental import pallas as pl
from jax.experimental.pallas import tpu as pltpu


def _affine_kernel(gain_ref, bias_ref, x_ref, o_ref):
    # gain/bias are shape-(1,) f32 scalars living in SMEM.
    g = gain_ref[0]
    b = bias_ref[0]
    # Compute in f32 (PyTorch promotes x * f32_gain + f32_bias to f32);
    # the cast on store is a no-op when o_ref is already f32.  The one
    # mul + add per vreg is fully hidden under the HBM DMA stream.
    x = x_ref[...].astype(jnp.float32)
    o_ref[...] = (x * g + b).astype(o_ref.dtype)


def _round_up(n, m):
    return ((n + m - 1) // m) * m


def _pick_lanes(total):
    # Prefer a lane width that divides the element count exactly so the whole
    # tensor is a dense (rows, lanes) slab: no padding, no output slice.
    for lanes in (512, 256, 128):
        if total % lanes == 0:
            return lanes
    return 512  # ragged: remainder (< 512 elems) handled by an XLA epilogue


def affine(x, gain, bias, *, target_tile_bytes=4 << 20):
    """Elementwise affine: x * gain + bias (gain/bias are shape-(1,) params)."""
    orig_shape = x.shape
    total = x.size
    gain = gain.astype(jnp.float32)
    bias = bias.astype(jnp.float32)
    # PyTorch type promotion: f32 stays f32, bf16 * f32 + f32 -> f32.
    out_dtype = jnp.result_type(x.dtype, jnp.float32)

    lanes = _pick_lanes(total)
    main = (total // lanes) * lanes          # elements handled by the kernel
    rem = total - main                       # < lanes elements, XLA epilogue
    rows = main // lanes

    flat = x.reshape(-1)

    if rows == 0:
        # Tiny tensor: not worth a kernel launch.
        y = (flat.astype(jnp.float32) * gain[0] + bias[0]).astype(out_dtype)
        return y.reshape(orig_shape)

    # --- Tile sizing: by bytes, dtype-aware --------------------------------
    itemsize = x.dtype.itemsize
    out_itemsize = jnp.dtype(out_dtype).itemsize
    # Minimum legal sublane multiple: 8 for 4-byte, 16 for 2-byte, 32 for 1-byte.
    sublane = max(8, 32 // max(itemsize, 1))
    desired_rows = max(sublane, target_tile_bytes // (lanes * itemsize))
    if rows >= 2 * sublane:
        # Keep at least two grid steps so a v7x megacore can split the row
        # loop across its two TensorCores (no-op on single-TC v5e/v6e).
        desired_rows = min(desired_rows, _round_up(pl.cdiv(rows, 2), sublane))
    # tile_rows is either a multiple of `sublane` (< rows) or the full row
    # extent; both are legal blocks, and Pallas masks the final partial block,
    # so no wrapper-side padding is ever needed.
    tile_rows = min(_round_up(desired_rows, sublane), rows)
    grid = (pl.cdiv(rows, tile_rows),)

    # Double-buffered footprint: 2 input tiles + 2 output tiles (+ headroom).
    footprint = 2 * tile_rows * lanes * (itemsize + out_itemsize)
    vmem_limit = min(64 << 20, max(32 << 20, footprint + (8 << 20)))

    x2 = flat[:main].reshape(rows, lanes) if rem else flat.reshape(rows, lanes)

    # Write the result in place over x2 when dtypes match (no separate output
    # allocation; lets XLA elide surrounding reshape copies).
    aliases = {2: 0} if out_dtype == x.dtype else {}

    out_main = pl.pallas_call(
        _affine_kernel,
        out_shape=jax.ShapeDtypeStruct((rows, lanes), out_dtype),
        grid=grid,
        in_specs=[
            pl.BlockSpec(memory_space=pltpu.SMEM),               # gain (1,)
            pl.BlockSpec(memory_space=pltpu.SMEM),               # bias (1,)
            pl.BlockSpec((tile_rows, lanes), lambda i: (i, 0)),  # x tile
        ],
        out_specs=pl.BlockSpec((tile_rows, lanes), lambda i: (i, 0)),
        compiler_params=pltpu.CompilerParams(
            dimension_semantics=("parallel",),
            vmem_limit_bytes=vmem_limit,
        ),
        input_output_aliases=aliases,
    )(gain, bias, x2)

    if rem:
        # Ragged tail (< lanes elements): tiny XLA epilogue.  The concat only
        # happens when no lane width in {512, 256, 128} divides the size.
        out_rem = (flat[main:].astype(jnp.float32) * gain[0] + bias[0]).astype(out_dtype)
        return jnp.concatenate([out_main.reshape(-1), out_rem]).reshape(orig_shape)
    return out_main.reshape(orig_shape)


if __name__ == "__main__":
    key = jax.random.PRNGKey(0)
    x = jax.random.normal(key, (2, 4, 16, 16), dtype=jnp.float32)

    # Deterministic parameter init, matching Affine.__init__:
    #   gain = ones(1), bias = zeros(1)
    gain = jnp.ones((1,), dtype=jnp.float32)
    bias = jnp.zeros((1,), dtype=jnp.float32)

    affine_jit = jax.jit(affine)
    y = jax.block_until_ready(affine_jit(x, gain, bias))

    # Reference check (pure JAX)
    y_ref = x * gain + bias
    assert y.shape == x.shape
    assert y.dtype == y_ref.dtype
    assert jnp.allclose(y, y_ref, atol=1e-6), "mismatch vs reference"

    print("KERNEL_OK")
</pallas_src>

<mosaic_0001>
module attributes {stable_mosaic.version = 11 : i64} {
  func.func @_affine_kernel(%arg0: i32, %arg1: memref<1xf32, #tpu.memory_space<smem>>, %arg2: memref<1xf32, #tpu.memory_space<smem>>, %arg3: memref<4x512xf32, #tpu.memory_space<vmem>>, %arg4: memref<4x512xf32, #tpu.memory_space<vmem>>) attributes {dimension_semantics = [#tpu.dimension_semantics<parallel>], iteration_bounds = array<i64: 1>, scalar_prefetch = 0 : i64, scratch_operands = 0 : i64, tpu.core_type = #tpu.core_type<tc>, window_params = [{transform_indices = @transform_0, window_bounds = array<i64: 1>}, {transform_indices = @transform_1, window_bounds = array<i64: 1>}, {transform_indices = @transform_2, window_bounds = array<i64: 4, 512>}, {transform_indices = @transform_3, window_bounds = array<i64: 4, 512>}]} {
    %c0 = arith.constant 0 : index
    %0 = memref.load %arg1[%c0] : memref<1xf32, #tpu.memory_space<smem>>
    %c0_0 = arith.constant 0 : index
    %1 = memref.load %arg2[%c0_0] : memref<1xf32, #tpu.memory_space<smem>>
    %c0_1 = arith.constant 0 : index
    %c0_2 = arith.constant 0 : index
    %2 = vector.load %arg3[%c0_1, %c0_2] : memref<4x512xf32, #tpu.memory_space<vmem>>, vector<4x512xf32>
    %3 = vector.broadcast %0 : f32 to vector<4x512xf32>
    %4 = arith.mulf %2, %3 : vector<4x512xf32>
    %5 = vector.broadcast %1 : f32 to vector<4x512xf32>
    %6 = arith.addf %4, %5 : vector<4x512xf32>
    %c0_3 = arith.constant 0 : index
    %c0_4 = arith.constant 0 : index
    %7 = vector.load %arg4[%c0_3, %c0_4] : memref<4x512xf32, #tpu.memory_space<vmem>>, vector<4x512xf32>
    tpu.vector_store %arg4[%c0_3, %c0_4], %6 {strides = array<i32>} : memref<4x512xf32, #tpu.memory_space<vmem>>, vector<4x512xf32>,
    return
  }
  func.func @transform_0(%arg0: i32) -> i32 {
    %c0_i32 = arith.constant 0 : i32
    %c0_i32_0 = arith.constant 0 : i32
    return %c0_i32 : i32
  }
  func.func @transform_1(%arg0: i32) -> i32 {
    %c0_i32 = arith.constant 0 : i32
    %c0_i32_0 = arith.constant 0 : i32
    return %c0_i32 : i32
  }
  func.func @transform_2(%arg0: i32) -> (i32, i32) {
    %c0_i32 = arith.constant 0 : i32
    %c0_i32_0 = arith.constant 0 : i32
    return %arg0, %c0_i32 : i32, i32
  }
  func.func @transform_3(%arg0: i32) -> (i32, i32) {
    %c0_i32 = arith.constant 0 : i32
    %c0_i32_0 = arith.constant 0 : i32
    return %arg0, %c0_i32 : i32, i32
  }
}

</mosaic_0001>

<llo_original>
// kernel: affine.1
$region0: #{affine.1}
  #allocation0 [shape = 'u32[]', space=smem, size = 0x4, offset = 0x4, fixed_abs, tag = 'smem constant byte address 0x4 - core index']
  #allocation1 [shape = 'u32[144,128]{1,0:T(1,128)}', space=vmem, size = 0x12000, scoped, tag = 'internal scratch']
  #allocation2 [shape = 'f32[1]{0:T(128)S(6)}', space=smem, size = 0x200, scoped, tag = 'scoped memory for affine.1']
  #allocation3 [shape = 'f32[1]{0:T(128)S(6)}', space=smem, size = 0x200, scoped, tag = 'scoped memory for affine.1']
  %s0 = inlined_call_operand.<no memory space> [shape: f32[1], index: 0, kind: input, shape index: {}]
  %s1 = inlined_call_operand.<no memory space> [shape: f32[1], index: 1, kind: input, shape index: {}]
  %s2 = inlined_call_operand.vmem [shape: f32[4,512], index: 2, kind: input, shape index: {}, may-alias: {2,3}]
  %s3 = inlined_call_operand.vmem [shape: f32[4,512], index: 3, kind: output, shape index: {}, may-alias: {2,3}]
  %s4 = sld [smem:[#allocation0]]
  $region22: #{affine.1} parent=0
    _
  %s6 = ssub.s32 1, %s4
  %s7 = scalar_select 0, %s6, %s4
  %8 = sst [smem:[#allocation2]] %s0
  %9 = sst [smem:[#allocation3]] %s1
  // Predicated region
  $region2: #{affine.1} parent=0 // pred_check
    _
  $region3: #{affine.1} parent=0 // pred_check_branch
    %11 = sbr.rel (0) target = $region5
  $region4: #{affine.1} parent=0 // pred_region
    _
  $region5: #{affine.1} parent=0 // pred_fallthru
    _
  // Predicated region
  $region6: #{affine.1} parent=0 // pred_check
    _
  $region7: #{affine.1} parent=0 // pred_check_branch
    %13 = sbr.rel (0) target = $region9
  $region8: #{affine.1} parent=0 // pred_region
    _
  $region9: #{affine.1} parent=0 // pred_fallthru
    _
  // Predicated region
  $region10: #{affine.1} parent=0 // pred_check
    _
  $region11: #{affine.1} parent=0 // pred_check_branch
    %15 = sbr.rel (0) target = $region13
  $region12: #{affine.1} parent=0 // pred_region
    _
  $region13: #{affine.1} parent=0 // pred_fallthru
    _
  %s16 = sld [smem:[#allocation2]]
  %s17 = sld [smem:[#allocation3]]
  %v18 = vld [vmem:[%s2] sm:$0xff]
  %v19 = vld [vmem:[%s2 + $0x8] sm:$0xff]
  %v20 = vstv %s16
  %v21 = vmul.f32 %v18, %v20
  %v22 = vmul.f32 %v19, %v20
  %v23 = vstv %s17
  %v24 = vadd.f32 %v21, %v23
  %v25 = vadd.f32 %v22, %v23
  %26 = vst [vmem:[%s3] sm:$0xff] %v24
  %27 = vst [vmem:[%s3 + $0x8] sm:$0xff] %v25
  // Predicated region
  $region14: #{affine.1} parent=0 // pred_check
    _
  $region15: #{affine.1} parent=0 // pred_check_branch
    %29 = sbr.rel (0) target = $region17
  $region16: #{affine.1} parent=0 // pred_region
    _
  $region17: #{affine.1} parent=0 // pred_fallthru
    _
  // Predicated region
  $region18: #{affine.1} parent=0 // pred_check
    _
  $region19: #{affine.1} parent=0 // pred_check_branch
    %31 = sbr.rel (0) target = $region21
  $region20: #{affine.1} parent=0 // pred_region
    _
  $region21: #{affine.1} parent=0 // pred_fallthru
    _

</llo_original>
